<compile_context>
chip_gen: v7x
topology: tpu7x:2x2x1
jax: 0.10.0
libtpu: 0.0.40
codegen_flags: <defaults>
</compile_context>

<pallas_src>
import functools
import math

import jax
import jax.numpy as jnp
from jax.experimental import pallas as pl
from jax.experimental.pallas import tpu as pltpu


# -------------------- deterministic mel filterbank (torchaudio htk, norm=None) --------------------
def _hz_to_mel(freq):
    return 2595.0 * math.log10(1.0 + freq / 700.0)


def _mel_to_hz(mels):
    return 700.0 * (10.0 ** (mels / 2595.0) - 1.0)


def melscale_fbanks(n_freqs, f_min, f_max, n_mels, sample_rate):
    all_freqs = jnp.linspace(0.0, float(sample_rate // 2), n_freqs)
    m_min = _hz_to_mel(f_min)
    m_max = _hz_to_mel(f_max)
    m_pts = jnp.linspace(m_min, m_max, n_mels + 2)
    f_pts = _mel_to_hz(m_pts)
    f_diff = f_pts[1:] - f_pts[:-1]                       # (n_mels+1,)
    slopes = f_pts[None, :] - all_freqs[:, None]          # (n_freqs, n_mels+2)
    down_slopes = (-1.0 * slopes[:, :-2]) / f_diff[:-1]
    up_slopes = slopes[:, 2:] / f_diff[1:]
    fb = jnp.maximum(0.0, jnp.minimum(down_slopes, up_slopes))
    return fb.astype(jnp.float32)                         # (n_freqs, n_mels)


def _round_up(x, m):
    return ((x + m - 1) // m) * m


def _default_tile_n():
    """Per-generation tile so the double-buffered working set fits the default scoped VMEM."""
    try:
        kind = jax.devices()[0].device_kind.lower()
    except Exception:
        return 4096
    if "v4" in kind or "v5" in kind:
        return 4096      # 16 MiB default scoped VMEM on v5e
    return 8192          # v6e / v7x: ~18 MiB double-buffered, under the 32 MiB default


# -------------------- fused Pallas kernel --------------------
# One grid step processes one lane-dense tile (M, Tn) of the time (or batch*time) axis:
#   x    = relu(pinv(A) @ b_tile)            <- NNLS init (torch.clip(x, 0, None))
#   diff = A @ x - b_tile
#   grad = 1/N * A^T @ diff                  <- LBFGS closure gradient (A^T pre-transposed)
#   loss_partial = 0.5/N * sum(diff^2)       <- per-tile (1,1) partial, summed in the wrapper
def _fused_kernel(a_pinv_ref, a_ref, a_t_ref, b_ref, x_ref, grad_ref, loss_ref, *, inv_n):
    b = b_ref[...]                                                                   # (M, Tn)
    x = jnp.maximum(
        jnp.dot(a_pinv_ref[...], b, preferred_element_type=jnp.float32), 0.0)        # (F, Tn)
    x_ref[...] = x
    diff = jnp.dot(a_ref[...], x, preferred_element_type=jnp.float32) - b             # (M, Tn)
    # pre-transposed A^T input -> no in-kernel XLU transpose in front of the MXU push
    grad_ref[...] = inv_n * jnp.dot(a_t_ref[...], diff,
                                    preferred_element_type=jnp.float32)               # (F, Tn)
    loss_ref[...] = jnp.full((1, 1), 0.5 * inv_n * jnp.sum(diff * diff), jnp.float32)


def _nnls_grad_bft(a_pinv, a, a_t, mels_bmt, inv_n, *, tile_t):
    """Primary path: mels_bmt (B, M, T_pad) with T_pad % tile_t == 0; outputs in (B, F, T_pad)."""
    F_, M = a_pinv.shape
    Bsz, _, T_pad = mels_bmt.shape
    n_t = T_pad // tile_t
    kernel = functools.partial(_fused_kernel, inv_n=inv_n)
    x, grad, loss_parts = pl.pallas_call(
        kernel,
        out_shape=(
            jax.ShapeDtypeStruct((Bsz, F_, T_pad), jnp.float32),     # x_init, (B, F, T) layout
            jax.ShapeDtypeStruct((Bsz, F_, T_pad), jnp.float32),     # grad of first closure
            jax.ShapeDtypeStruct((Bsz, n_t, 1, 1), jnp.float32),     # per-tile loss partials
        ),
        grid=(Bsz, n_t),
        in_specs=[
            pl.BlockSpec((F_, M), lambda b, t: (0, 0)),              # pinv(A), resident
            pl.BlockSpec((M, F_), lambda b, t: (0, 0)),              # A, resident
            pl.BlockSpec((F_, M), lambda b, t: (0, 0)),              # A^T, resident
            pl.BlockSpec((None, M, tile_t), lambda b, t: (b, 0, t)),  # streamed mel tile
        ],
        out_specs=(
            pl.BlockSpec((None, F_, tile_t), lambda b, t: (b, 0, t)),
            pl.BlockSpec((None, F_, tile_t), lambda b, t: (b, 0, t)),
            pl.BlockSpec((None, None, 1, 1), lambda b, t: (b, t, 0, 0)),
        ),
        compiler_params=pltpu.CompilerParams(
            dimension_semantics=("parallel", "parallel")),
    )(a_pinv, a, a_t, mels_bmt)
    return x, grad, jnp.sum(loss_parts)


def _nnls_grad_collapsed(a_pinv, a, a_t, b_mt, inv_n, *, tile_n):
    """Fallback (small T): b_mt (M, N) lane-dense collapsed batch*time, N % tile_n == 0."""
    F_, M = a_pinv.shape
    N = b_mt.shape[1]
    n_tiles = N // tile_n
    kernel = functools.partial(_fused_kernel, inv_n=inv_n)
    x, grad, loss_parts = pl.pallas_call(
        kernel,
        out_shape=(
            jax.ShapeDtypeStruct((F_, N), jnp.float32),
            jax.ShapeDtypeStruct((F_, N), jnp.float32),
            jax.ShapeDtypeStruct((n_tiles, 1, 1), jnp.float32),
        ),
        grid=(n_tiles,),
        in_specs=[
            pl.BlockSpec((F_, M), lambda i: (0, 0)),
            pl.BlockSpec((M, F_), lambda i: (0, 0)),
            pl.BlockSpec((F_, M), lambda i: (0, 0)),
            pl.BlockSpec((M, tile_n), lambda i: (0, i)),
        ],
        out_specs=(
            pl.BlockSpec((F_, tile_n), lambda i: (0, i)),
            pl.BlockSpec((F_, tile_n), lambda i: (0, i)),
            pl.BlockSpec((None, 1, 1), lambda i: (i, 0, 0)),
        ),
        compiler_params=pltpu.CompilerParams(dimension_semantics=("parallel",)),
    )(a_pinv, a, a_t, b_mt)
    return x, grad, jnp.sum(loss_parts)


# -------------------- module setup / forward --------------------
def precompute_operands(fb):
    """fb: (n_freq, n_mels). Compute the fb-derived constants ONCE (hoisted out of forward)."""
    A = fb.T                              # mel_basis (M, F)
    A_T = fb                              # (F, M), pre-transposed for the gradient matmul
    A_pinv = jnp.linalg.pinv(A)           # (F, M) -- dense linalg setup in plain JAX (glue)
    return A_pinv, A, A_T


def dtc_inverse_stfs_forward(melspec, ops, *, tile_n=None):
    """DTCInverseSTFS.forward: melspec (..., n_mels, T) -> (x, loss, grad) of first closure."""
    a_pinv, a, a_t = ops
    if tile_n is None:
        tile_n = _default_tile_n()
    shape = melspec.shape
    mels = melspec.reshape(-1, shape[-2], shape[-1]).astype(jnp.float32)   # (B, M, T)
    Bsz, M, T = mels.shape
    F_ = a_pinv.shape[0]
    inv_n = 1.0 / float(mels.size)         # 1 / B.storage().size()

    if T >= 128:
        # ---- primary path: 2-D (batch, time-tile) grid, outputs already in (B, F, T) ----
        tile_t = _round_up(min(tile_n, _round_up(T, 128)), 128)
        T_pad = _round_up(T, tile_t)
        # keep >= 2 grid steps when possible so both v7x TensorCores get work
        if Bsz * (T_pad // tile_t) < 2 and tile_t >= 256 and tile_t % 256 == 0:
            tile_t //= 2
            T_pad = _round_up(T, tile_t)
        if T_pad != T:
            # zero-padded columns give x=0, diff=0 -> contribute nothing to loss/grad
            mels = jnp.pad(mels, ((0, 0), (0, 0), (0, T_pad - T)))
        x, grad, loss = _nnls_grad_bft(a_pinv, a, a_t, mels, inv_n, tile_t=tile_t)
        if T_pad != T:
            x = x[:, :, :T]
            grad = grad[:, :, :T]
    else:
        # ---- fallback for small T: collapse batch into the lane axis for lane density ----
        b_mt = jnp.transpose(mels, (1, 0, 2)).reshape(M, Bsz * T)          # (M, B*T)
        N = Bsz * T
        tile = _round_up(min(tile_n, _round_up(N, 128)), 128)
        N_pad = _round_up(N, tile)
        if N_pad // tile < 2 and tile >= 256 and tile % 256 == 0:
            tile //= 2
            N_pad = _round_up(N, tile)
        if N_pad != N:
            b_mt = jnp.pad(b_mt, ((0, 0), (0, N_pad - N)))
        x_flat, grad_flat, loss = _nnls_grad_collapsed(
            a_pinv, a, a_t, b_mt, inv_n, tile_n=tile)
        x = jnp.transpose(x_flat[:, :N].reshape(F_, Bsz, T), (1, 0, 2))        # (B, F, T)
        grad = jnp.transpose(grad_flat[:, :N].reshape(F_, Bsz, T), (1, 0, 2))  # (B, F, T)

    # TODO(synk): the LBFGS_FIXED strong-Wolfe refinement loop (max_iter=500) is an iterative
    # host-side solver with no clean Pallas equivalent; only its per-iteration objective/gradient
    # hot path is implemented (fused into the kernel above).  When wiring the real loop, add a
    # closure-only variant (x in -> loss/grad out) so the pinv matmul + x store aren't re-done.
    return x, loss, grad


def make_dtc_inverse_stfs(fb, *, tile_n=None):
    """Factory: precompute fb-derived operands once, return a forward closure."""
    ops = precompute_operands(fb)

    def forward(melspec):
        return dtc_inverse_stfs_forward(melspec, ops, tile_n=tile_n)

    return forward


# -------------------- self-test --------------------
def _reference(melspec, fb):
    A = fb.T
    A_pinv = jnp.linalg.pinv(A)
    x_ref = jnp.maximum(jnp.einsum("fm,bmt->bft", A_pinv, melspec), 0.0)
    diff_ref = jnp.einsum("mf,bft->bmt", A, x_ref) - melspec
    loss_ref = 0.5 / melspec.size * jnp.sum(diff_ref ** 2)
    grad_ref = 1.0 / melspec.size * jnp.einsum("mf,bmt->bft", A, diff_ref)
    return x_ref, loss_ref, grad_ref


if __name__ == "__main__":
    key = jax.random.PRNGKey(0)
    batch, n_mels = 2, 32
    n_stft = 128
    sample_rate = 22050

    fb = melscale_fbanks(n_stft, 0.0, float(sample_rate // 2), n_mels, sample_rate)  # (F, M)
    forward = make_dtc_inverse_stfs(fb)   # fb-derived constants computed once here

    k1, k2 = jax.random.split(key)
    ok = True
    # (a) small-T fallback path (lane-collapsed), (b) primary (B, F, T)-layout path
    for k, time_steps in ((k1, 16), (k2, 256)):
        melspec = jax.random.uniform(k, (batch, n_mels, time_steps), dtype=jnp.float32)
        x, loss, grad = forward(melspec)
        (x, loss, grad) = jax.block_until_ready((x, loss, grad))

        x_ref, loss_ref, grad_ref = _reference(melspec, fb)
        ok &= x.shape == (batch, n_stft, time_steps)
        ok &= bool(jnp.allclose(x, x_ref, atol=1e-4, rtol=1e-4))
        ok &= bool(jnp.allclose(loss, loss_ref, atol=1e-5, rtol=1e-4))
        ok &= bool(jnp.allclose(grad, grad_ref, atol=1e-5, rtol=1e-4))

    assert ok
    print("KERNEL_OK")
</pallas_src>

<mosaic_0001>
module attributes {stable_mosaic.version = 11 : i64} {
  func.func @_fused_kernel(%arg0: i32, %arg1: memref<128x32xf32, #tpu.memory_space<vmem>>, %arg2: memref<32x128xf32, #tpu.memory_space<vmem>>, %arg3: memref<128x32xf32, #tpu.memory_space<vmem>>, %arg4: memref<32x128xf32, #tpu.memory_space<vmem>>, %arg5: memref<128x128xf32, #tpu.memory_space<vmem>>, %arg6: memref<128x128xf32, #tpu.memory_space<vmem>>, %arg7: memref<1x1x1xf32, #tpu.memory_space<vmem>>) attributes {dimension_semantics = [#tpu.dimension_semantics<parallel>], iteration_bounds = array<i64: 1>, scalar_prefetch = 0 : i64, scratch_operands = 0 : i64, tpu.core_type = #tpu.core_type<tc>, window_params = [{pipeline_mode = #tpu.pipeline_mode<synchronous>, transform_indices = @transform_0, window_bounds = array<i64: 128, 32>}, {pipeline_mode = #tpu.pipeline_mode<synchronous>, transform_indices = @transform_1, window_bounds = array<i64: 32, 128>}, {pipeline_mode = #tpu.pipeline_mode<synchronous>, transform_indices = @transform_2, window_bounds = array<i64: 128, 32>}, {transform_indices = @transform_3, window_bounds = array<i64: 32, 128>}, {transform_indices = @transform_4, window_bounds = array<i64: 128, 128>}, {transform_indices = @transform_5, window_bounds = array<i64: 128, 128>}, {transform_indices = @transform_6, window_bounds = array<i64: 1, 1, 1>}]} {
    %c0 = arith.constant 0 : index
    %c0_0 = arith.constant 0 : index
    %0 = vector.load %arg4[%c0, %c0_0] : memref<32x128xf32, #tpu.memory_space<vmem>>, vector<32x128xf32>
    %c0_1 = arith.constant 0 : index
    %c0_2 = arith.constant 0 : index
    %1 = vector.load %arg1[%c0_1, %c0_2] : memref<128x32xf32, #tpu.memory_space<vmem>>, vector<128x32xf32>
    %cst = arith.constant dense<0.000000e+00> : vector<128x128xf32>
    %2 = tpu.matmul %1, %0, %cst {dimension_numbers = #tpu.dot_dimension_numbers<[1], [0], [0], [1], [0, 0, 1, 1], [], []>} : vector<128x32xf32>, vector<32x128xf32>, vector<128x128xf32> -> vector<128x128xf32>
    %cst_3 = arith.constant 0.000000e+00 : f32
    %3 = vector.broadcast %cst_3 : f32 to vector<128x128xf32>
    %4 = arith.maximumf %2, %3 : vector<128x128xf32>
    %c0_4 = arith.constant 0 : index
    %c0_5 = arith.constant 0 : index
    %5 = vector.load %arg5[%c0_4, %c0_5] : memref<128x128xf32, #tpu.memory_space<vmem>>, vector<128x128xf32>
    tpu.vector_store %arg5[%c0_4, %c0_5], %4 {strides = array<i32>} : memref<128x128xf32, #tpu.memory_space<vmem>>, vector<128x128xf32>,
    %c0_6 = arith.constant 0 : index
    %c0_7 = arith.constant 0 : index
    %6 = vector.load %arg2[%c0_6, %c0_7] : memref<32x128xf32, #tpu.memory_space<vmem>>, vector<32x128xf32>
    %cst_8 = arith.constant dense<0.000000e+00> : vector<32x128xf32>
    %7 = tpu.matmul %6, %4, %cst_8 {dimension_numbers = #tpu.dot_dimension_numbers<[1], [0], [0], [1], [0, 0, 1, 1], [], []>} : vector<32x128xf32>, vector<128x128xf32>, vector<32x128xf32> -> vector<32x128xf32>
    %8 = arith.subf %7, %0 : vector<32x128xf32>
    %c0_9 = arith.constant 0 : index
    %c0_10 = arith.constant 0 : index
    %9 = vector.load %arg3[%c0_9, %c0_10] : memref<128x32xf32, #tpu.memory_space<vmem>>, vector<128x32xf32>
    %cst_11 = arith.constant dense<0.000000e+00> : vector<128x128xf32>
    %10 = tpu.matmul %9, %8, %cst_11 {dimension_numbers = #tpu.dot_dimension_numbers<[1], [0], [0], [1], [0, 0, 1, 1], [], []>} : vector<128x32xf32>, vector<32x128xf32>, vector<128x128xf32> -> vector<128x128xf32>
    %cst_12 = arith.constant 9.765625E-4 : f32
    %11 = vector.broadcast %cst_12 : f32 to vector<128x128xf32>
    %12 = arith.mulf %11, %10 : vector<128x128xf32>
    %c0_13 = arith.constant 0 : index
    %c0_14 = arith.constant 0 : index
    %13 = vector.load %arg6[%c0_13, %c0_14] : memref<128x128xf32, #tpu.memory_space<vmem>>, vector<128x128xf32>
    tpu.vector_store %arg6[%c0_13, %c0_14], %12 {strides = array<i32>} : memref<128x128xf32, #tpu.memory_space<vmem>>, vector<128x128xf32>,
    %14 = arith.mulf %8, %8 : vector<32x128xf32>
    %15 = vector.shape_cast %14 : vector<32x128xf32> to vector<1x32x128xf32>
    %cst_15 = arith.constant dense<0.000000e+00> : vector<1xf32>
    %16 = vector.multi_reduction <add>, %15, %cst_15 [1, 2] : vector<1x32x128xf32> to vector<1xf32>
    %17 = vector.shape_cast %16 : vector<1xf32> to vector<1x1x1xf32>
    %18 = vector.extract %17[0, 0, 0] : f32 from vector<1x1x1xf32>
    %cst_16 = arith.constant 4.8828125E-4 : f32
    %19 = arith.mulf %cst_16, %18 : f32
    %20 = vector.broadcast %19 : f32 to vector<1x1xf32>
    %c0_17 = arith.constant 0 : index
    %c0_18 = arith.constant 0 : index
    %c0_19 = arith.constant 0 : index
    %21 = vector.load %arg7[%c0_17, %c0_18, %c0_19] : memref<1x1x1xf32, #tpu.memory_space<vmem>>, vector<1x1x1xf32>
    %22 = vector.shape_cast %21 : vector<1x1x1xf32> to vector<1x1xf32>
    %23 = vector.shape_cast %20 : vector<1x1xf32> to vector<1x1x1xf32>
    tpu.vector_store %arg7[%c0_17, %c0_18, %c0_19], %23 {strides = array<i32>} : memref<1x1x1xf32, #tpu.memory_space<vmem>>, vector<1x1x1xf32>,
    return
  }
  func.func @transform_0(%arg0: i32) -> (i32, i32) {
    %c0_i32 = arith.constant 0 : i32
    %c0_i32_0 = arith.constant 0 : i32
    %c0_i32_1 = arith.constant 0 : i32
    return %c0_i32, %c0_i32_0 : i32, i32
  }
  func.func @transform_1(%arg0: i32) -> (i32, i32) {
    %c0_i32 = arith.constant 0 : i32
    %c0_i32_0 = arith.constant 0 : i32
    %c0_i32_1 = arith.constant 0 : i32
    return %c0_i32, %c0_i32_0 : i32, i32
  }
  func.func @transform_2(%arg0: i32) -> (i32, i32) {
    %c0_i32 = arith.constant 0 : i32
    %c0_i32_0 = arith.constant 0 : i32
    %c0_i32_1 = arith.constant 0 : i32
    return %c0_i32, %c0_i32_0 : i32, i32
  }
  func.func @transform_3(%arg0: i32) -> (i32, i32) {
    %c0_i32 = arith.constant 0 : i32
    %c0_i32_0 = arith.constant 0 : i32
    return %c0_i32, %arg0 : i32, i32
  }
  func.func @transform_4(%arg0: i32) -> (i32, i32) {
    %c0_i32 = arith.constant 0 : i32
    %c0_i32_0 = arith.constant 0 : i32
    return %c0_i32, %arg0 : i32, i32
  }
  func.func @transform_5(%arg0: i32) -> (i32, i32) {
    %c0_i32 = arith.constant 0 : i32
    %c0_i32_0 = arith.constant 0 : i32
    return %c0_i32, %arg0 : i32, i32
  }
  func.func @transform_6(%arg0: i32) -> (i32, i32, i32) {
    %c0_i32 = arith.constant 0 : i32
    %c0_i32_0 = arith.constant 0 : i32
    %c0_i32_1 = arith.constant 0 : i32
    return %arg0, %c0_i32, %c0_i32_0 : i32, i32, i32
  }
}

</mosaic_0001>

<llo_original>
// kernel: tpu_custom_call.1
$region0: #{tpu_custom_call.1}
  #allocation0 [shape = 'u32[]', space=smem, size = 0x4, offset = 0x4, fixed_abs, tag = 'smem constant byte address 0x4 - core index']
  #allocation1 [shape = 'u32[144,128]{1,0:T(1,128)}', space=vmem, size = 0x12000, scoped, tag = 'internal scratch']
  %s0 = inlined_call_operand.vmem [shape: f32[128,32], index: 0, kind: input, shape index: {}]
  %s1 = inlined_call_operand.vmem [shape: f32[32,128], index: 1, kind: input, shape index: {}]
  %s2 = inlined_call_operand.vmem [shape: f32[128,32], index: 2, kind: input, shape index: {}]
  %s3 = inlined_call_operand.vmem [shape: f32[32,128], index: 3, kind: input, shape index: {}]
  %s4 = inlined_call_operand.hbm [shape: f32[128,128], index: 4, kind: output, shape index: {0}]
  %s5 = inlined_call_operand.hbm [shape: f32[128,128], index: 5, kind: output, shape index: {1}]
  %s6 = inlined_call_operand.hbm [shape: f32[1,1,1], index: 6, kind: output, shape index: {2}]
  %7 = xla_tuple %s4, %s5, %s6
  %s8 = sld [smem:[#allocation0]]
  $region42: #{tpu_custom_call.1} parent=0
    _
  %s10 = ssub.s32 1, %s8
  %s11 = scalar_select 0, %s10, %s8
  $region1: #{tpu_custom_call.1} parent=0
    #allocation2 [shape = 'u8[65536]{0}', space=vmem, size = 0x10000, scoped, tag = 'output window, operand 0, single buffered']
    #allocation3 [shape = 's32[1]{0}', space=sflag, size = 0x4, scoped, tag = 'scoped memory for tpu_custom_call.1']
    #allocation4 [shape = 'u8[65536]{0}', space=vmem, size = 0x10000, scoped, tag = 'output window, operand 1, single buffered']
    #allocation5 [shape = 's32[1]{0}', space=sflag, size = 0x4, scoped, tag = 'scoped memory for tpu_custom_call.1']
    #allocation6 [shape = 'u8[512]{0}', space=vmem, size = 0x400, scoped, tag = 'output window, operand 2, single buffered']
    %12 = vsyncpa [#allocation3], 0
    %13 = vsyncpa [#allocation5], 0
    // Predicated region
    $region2: #{tpu_custom_call.1} parent=1 // pred_check
      _
    $region3: #{tpu_custom_call.1} parent=1 // pred_check_branch
      %15 = sbr.rel (0) target = $region5
    $region4: #{tpu_custom_call.1} parent=1 // pred_region
      _
    $region5: #{tpu_custom_call.1} parent=1 // pred_fallthru
      _
    // Predicated region
    $region6: #{tpu_custom_call.1} parent=1 // pred_check
      _
    $region7: #{tpu_custom_call.1} parent=1 // pred_check_branch
      %17 = sbr.rel (0) target = $region9
    $region8: #{tpu_custom_call.1} parent=1 // pred_region
      _
    $region9: #{tpu_custom_call.1} parent=1 // pred_fallthru
      _
    // Predicated region
    $region10: #{tpu_custom_call.1} parent=1 // pred_check
      _
    $region11: #{tpu_custom_call.1} parent=1 // pred_check_branch
      %19 = sbr.rel (0) target = $region13
    $region12: #{tpu_custom_call.1} parent=1 // pred_region
      _
    $region13: #{tpu_custom_call.1} parent=1 // pred_fallthru
      _
    // Predicated region
    $region14: #{tpu_custom_call.1} parent=1 // pred_check
      _
    $region15: #{tpu_custom_call.1} parent=1 // pred_check_branch
      %21 = sbr.rel (0) target = $region17
    $region16: #{tpu_custom_call.1} parent=1 // pred_region
      _
    $region17: #{tpu_custom_call.1} parent=1 // pred_fallthru
      _
    %v22 = vld [vmem:[%s3] sm:$0xff]
    %v23 = vld [vmem:[%s3 + $0x8] sm:$0xff]
    %v24 = vld [vmem:[%s3 + $0x10] sm:$0xff]
    %v25 = vld [vmem:[%s3 + $0x18] sm:$0xff]
    %v26 = vld [vmem:[%s0] sm:$0xff]
    %v27 = vld [vmem:[%s0 + $0x8] sm:$0xff]
    %v28 = vld [vmem:[%s0 + $0x10] sm:$0xff]
    %v29 = vld [vmem:[%s0 + $0x18] sm:$0xff]
    %v30 = vld [vmem:[%s0 + $0x20] sm:$0xff]
    %v31 = vld [vmem:[%s0 + $0x28] sm:$0xff]
    %v32 = vld [vmem:[%s0 + $0x30] sm:$0xff]
    %v33 = vld [vmem:[%s0 + $0x38] sm:$0xff]
    %v34 = vld [vmem:[%s0 + $0x40] sm:$0xff]
    %v35 = vld [vmem:[%s0 + $0x48] sm:$0xff]
    %v36 = vld [vmem:[%s0 + $0x50] sm:$0xff]
    %v37 = vld [vmem:[%s0 + $0x58] sm:$0xff]
    %v38 = vld [vmem:[%s0 + $0x60] sm:$0xff]
    %v39 = vld [vmem:[%s0 + $0x68] sm:$0xff]
    %v40 = vld [vmem:[%s0 + $0x70] sm:$0xff]
    %v41 = vld [vmem:[%s0 + $0x78] sm:$0xff]
    %vm42 = vcmask 261120
    %v44 = vsel %vm42, %v26, 0
    %v47 = vsel %vm42, %v27, 0
    %v50 = vsel %vm42, %v28, 0
    %v53 = vsel %vm42, %v29, 0
    %v56 = vsel %vm42, %v30, 0
    %v59 = vsel %vm42, %v31, 0
    %v62 = vsel %vm42, %v32, 0
    %v65 = vsel %vm42, %v33, 0
    %v68 = vsel %vm42, %v34, 0
    %v71 = vsel %vm42, %v35, 0
    %v74 = vsel %vm42, %v36, 0
    %v77 = vsel %vm42, %v37, 0
    %v80 = vsel %vm42, %v38, 0
    %v83 = vsel %vm42, %v39, 0
    %v86 = vsel %vm42, %v40, 0
    %v89 = vsel %vm42, %v41, 0
    %91 = vmatprep.subr.mxu0 0.0
    %92 = vmatpush1.msra.mxu0 %v22
    %93 = vmatprep.subr.mxu0 0.0
    %94 = vmatpush1.msra.mxu0 %v23
    %95 = vmatprep.subr.mxu0 0.0
    %96 = vmatpush1.msra.mxu0 %v24
    %97 = vmatprep.subr.mxu0 0.0
    %98 = vmatpush1.msra.mxu0 %v25
    %99 = vmatprep.subr.mxu0 0.0
    %100 = vmatpush1.msra.mxu0 0.0
    %101 = vmatprep.subr.mxu0 0.0
    %102 = vmatpush1.msra.mxu0 0.0
    %103 = vmatprep.subr.mxu0 0.0
    %104 = vmatpush1.msra.mxu0 0.0
    %105 = vmatprep.subr.mxu0 0.0
    %106 = vmatpush1.msra.mxu0 0.0
    %107 = vmatprep.subr.mxu0 0.0
    %108 = vmatpush1.msra.mxu0 0.0
    %109 = vmatprep.subr.mxu0 0.0
    %110 = vmatpush1.msra.mxu0 0.0
    %111 = vmatprep.subr.mxu0 0.0
    %112 = vmatpush1.msra.mxu0 0.0
    %113 = vmatprep.subr.mxu0 0.0
    %114 = vmatpush1.msra.mxu0 0.0
    %115 = vmatprep.subr.mxu0 0.0
    %116 = vmatpush1.msra.mxu0 0.0
    %117 = vmatprep.subr.mxu0 0.0
    %118 = vmatpush1.msra.mxu0 0.0
    %119 = vmatprep.subr.mxu0 0.0
    %120 = vmatpush1.msra.mxu0 0.0
    %121 = vmatprep.subr.mxu0 0.0
    %122 = vmatpush1.msra.mxu0 0.0
    %123 = vmatprep.subr.mxu0 0.0
    %124 = vmatpush1.msra.mxu0 0.0
    %125 = vmatprep.subr.mxu0 0.0
    %126 = vmatpush1.msra.mxu0 0.0
    %127 = vmatprep.subr.mxu0 0.0
    %128 = vmatpush1.msra.mxu0 0.0
    %129 = vmatprep.subr.mxu0 0.0
    %130 = vmatpush1.msra.mxu0 0.0
    %131 = vmatprep.subr.mxu0 0.0
    %132 = vmatpush1.msra.mxu0 0.0
    %133 = vmatprep.subr.mxu0 0.0
    %134 = vmatpush1.msra.mxu0 0.0
    %135 = vmatprep.subr.mxu0 0.0
    %136 = vmatpush1.msra.mxu0 0.0
    %137 = vmatprep.subr.mxu0 0.0
    %138 = vmatpush1.msra.mxu0 0.0
    %139 = vmatprep.subr.mxu0 0.0
    %140 = vmatpush1.msra.mxu0 0.0
    %141 = vmatprep.subr.mxu0 0.0
    %142 = vmatpush1.msra.mxu0 0.0
    %143 = vmatprep.subr.mxu0 0.0
    %144 = vmatpush1.msra.mxu0 0.0
    %145 = vmatprep.subr.mxu0 0.0
    %146 = vmatpush1.msra.mxu0 0.0
    %147 = vmatprep.subr.mxu0 0.0
    %148 = vmatpush1.msra.mxu0 0.0
    %149 = vmatprep.subr.mxu0 0.0
    %150 = vmatpush1.msra.mxu0 0.0
    %151 = vmatprep.subr.mxu0 0.0
    %152 = vmatpush1.msra.mxu0 0.0
    %153 = vmatprep.subr.mxu0 0.0
    %154 = vmatpush1.msra.mxu0 0.0
    %155 = vmatprep.mubr.f32.mxu0 0.0
    %156 = vmatmul.mubr.f32.gmra.mrb[0].mxu0 %v44
    %v157 = vpop.f32.mrb[0].mxu0
    %v158 = vadd.f32 0.0, %v157
    %v159 = vpop.f32.mrb[0].mxu0
    %160 = vmatprep.mubr.f32.mxu0 0.0
    %161 = vmatmul.mubr.f32.gmra.mrb[0].mxu0 %v47
    %v162 = vpop.f32.mrb[0].mxu0
    %v163 = vadd.f32 0.0, %v162
    %v164 = vpop.f32.mrb[0].mxu0
    %165 = vmatprep.mubr.f32.mxu0 0.0
    %166 = vmatmul.mubr.f32.gmra.mrb[0].mxu0 %v50
    %v167 = vpop.f32.mrb[0].mxu0
    %v168 = vadd.f32 0.0, %v167
    %v169 = vpop.f32.mrb[0].mxu0
    %170 = vmatprep.mubr.f32.mxu0 0.0
    %171 = vmatmul.mubr.f32.gmra.mrb[0].mxu0 %v53
    %v172 = vpop.f32.mrb[0].mxu0
    %v173 = vadd.f32 0.0, %v172
    %v174 = vpop.f32.mrb[0].mxu0
    %175 = vmatprep.mubr.f32.mxu0 0.0
    %176 = vmatmul.mubr.f32.gmra.mrb[0].mxu0 %v56
    %v177 = vpop.f32.mrb[0].mxu0
    %v178 = vadd.f32 0.0, %v177
    %v179 = vpop.f32.mrb[0].mxu0
    %180 = vmatprep.mubr.f32.mxu0 0.0
    %181 = vmatmul.mubr.f32.gmra.mrb[0].mxu0 %v59
    %v182 = vpop.f32.mrb[0].mxu0
    %v183 = vadd.f32 0.0, %v182
    %v184 = vpop.f32.mrb[0].mxu0
    %185 = vmatprep.mubr.f32.mxu0 0.0
    %186 = vmatmul.mubr.f32.gmra.mrb[0].mxu0 %v62
    %v187 = vpop.f32.mrb[0].mxu0
    %v188 = vadd.f32 0.0, %v187
    %v189 = vpop.f32.mrb[0].mxu0
    %190 = vmatprep.mubr.f32.mxu0 0.0
    %191 = vmatmul.mubr.f32.gmra.mrb[0].mxu0 %v65
    %v192 = vpop.f32.mrb[0].mxu0
    %v193 = vadd.f32 0.0, %v192
    %v194 = vpop.f32.mrb[0].mxu0
    %195 = vmatprep.mubr.f32.mxu0 0.0
    %196 = vmatmul.mubr.f32.gmra.mrb[0].mxu0 %v68
    %v197 = vpop.f32.mrb[0].mxu0
    %v198 = vadd.f32 0.0, %v197
    %v199 = vpop.f32.mrb[0].mxu0
    %200 = vmatprep.mubr.f32.mxu0 0.0
    %201 = vmatmul.mubr.f32.gmra.mrb[0].mxu0 %v71
    %v202 = vpop.f32.mrb[0].mxu0
    %v203 = vadd.f32 0.0, %v202
    %v204 = vpop.f32.mrb[0].mxu0
    %205 = vmatprep.mubr.f32.mxu0 0.0
    %206 = vmatmul.mubr.f32.gmra.mrb[0].mxu0 %v74
    %v207 = vpop.f32.mrb[0].mxu0
    %v208 = vadd.f32 0.0, %v207
    %v209 = vpop.f32.mrb[0].mxu0
    %210 = vmatprep.mubr.f32.mxu0 0.0
    %211 = vmatmul.mubr.f32.gmra.mrb[0].mxu0 %v77
    %v212 = vpop.f32.mrb[0].mxu0
    %v213 = vadd.f32 0.0, %v212
    %v214 = vpop.f32.mrb[0].mxu0
    %215 = vmatprep.mubr.f32.mxu0 0.0
    %216 = vmatmul.mubr.f32.gmra.mrb[0].mxu0 %v80
    %v217 = vpop.f32.mrb[0].mxu0
    %v218 = vadd.f32 0.0, %v217
    %v219 = vpop.f32.mrb[0].mxu0
    %220 = vmatprep.mubr.f32.mxu0 0.0
    %221 = vmatmul.mubr.f32.gmra.mrb[0].mxu0 %v83
    %v222 = vpop.f32.mrb[0].mxu0
    %v223 = vadd.f32 0.0, %v222
    %v224 = vpop.f32.mrb[0].mxu0
    %225 = vmatprep.mubr.f32.mxu0 0.0
    %226 = vmatmul.mubr.f32.gmra.mrb[0].mxu0 %v86
    %v227 = vpop.f32.mrb[0].mxu0
    %v228 = vadd.f32 0.0, %v227
    %v229 = vpop.f32.mrb[0].mxu0
    %230 = vmatprep.mubr.f32.mxu0 0.0
    %231 = vmatmul.mubr.f32.gmra.mrb[0].mxu0 %v89
    %v232 = vpop.f32.mrb[0].mxu0
    %v233 = vadd.f32 0.0, %v232
    %v234 = vpop.f32.mrb[0].mxu0
    %235 = vdwg.mxu0
    %v236 = vmax.f32 %v158, 0.0
    %v237 = vmax.f32 %v163, 0.0
    %v238 = vmax.f32 %v168, 0.0
    %v239 = vmax.f32 %v173, 0.0
    %v240 = vmax.f32 %v178, 0.0
    %v241 = vmax.f32 %v183, 0.0
    %v242 = vmax.f32 %v188, 0.0
    %v243 = vmax.f32 %v193, 0.0
    %v244 = vmax.f32 %v198, 0.0
    %v245 = vmax.f32 %v203, 0.0
    %v246 = vmax.f32 %v208, 0.0
    %v247 = vmax.f32 %v213, 0.0
    %v248 = vmax.f32 %v218, 0.0
    %v249 = vmax.f32 %v223, 0.0
    %v250 = vmax.f32 %v228, 0.0
    %v251 = vmax.f32 %v233, 0.0
    %252 = vst [vmem:[#allocation2] sm:$0xff] %v236
    %253 = vst [vmem:[#allocation2 + $0x8] sm:$0xff] %v237
    %254 = vst [vmem:[#allocation2 + $0x10] sm:$0xff] %v238
    %255 = vst [vmem:[#allocation2 + $0x18] sm:$0xff] %v239
    %256 = vst [vmem:[#allocation2 + $0x20] sm:$0xff] %v240
    %257 = vst [vmem:[#allocation2 + $0x28] sm:$0xff] %v241
    %258 = vst [vmem:[#allocation2 + $0x30] sm:$0xff] %v242
    %259 = vst [vmem:[#allocation2 + $0x38] sm:$0xff] %v243
    %260 = vst [vmem:[#allocation2 + $0x40] sm:$0xff] %v244
    %261 = vst [vmem:[#allocation2 + $0x48] sm:$0xff] %v245
    %262 = vst [vmem:[#allocation2 + $0x50] sm:$0xff] %v246
    %263 = vst [vmem:[#allocation2 + $0x58] sm:$0xff] %v247
    %264 = vst [vmem:[#allocation2 + $0x60] sm:$0xff] %v248
    %265 = vst [vmem:[#allocation2 + $0x68] sm:$0xff] %v249
    %266 = vst [vmem:[#allocation2 + $0x70] sm:$0xff] %v250
    %267 = vst [vmem:[#allocation2 + $0x78] sm:$0xff] %v251
    %v268 = vld [vmem:[%s1] sm:$0xff]
    %v269 = vld [vmem:[%s1 + $0x8] sm:$0xff]
    %v270 = vld [vmem:[%s1 + $0x10] sm:$0xff]
    %v271 = vld [vmem:[%s1 + $0x18] sm:$0xff]
    %272 = vmatprep.subr.mxu0 0.0
    %273 = vmatpush1.msra.mxu0 %v236
    %274 = vmatprep.subr.mxu0 0.0
    %275 = vmatpush1.msra.mxu0 %v237
    %276 = vmatprep.subr.mxu0 0.0
    %277 = vmatpush1.msra.mxu0 %v238
    %278 = vmatprep.subr.mxu0 0.0
    %279 = vmatpush1.msra.mxu0 %v239
    %280 = vmatprep.subr.mxu0 0.0
    %281 = vmatpush1.msra.mxu0 %v240
    %282 = vmatprep.subr.mxu0 0.0
    %283 = vmatpush1.msra.mxu0 %v241
    %284 = vmatprep.subr.mxu0 0.0
    %285 = vmatpush1.msra.mxu0 %v242
    %286 = vmatprep.subr.mxu0 0.0
    %287 = vmatpush1.msra.mxu0 %v243
    %288 = vmatprep.subr.mxu0 0.0
    %289 = vmatpush1.msra.mxu0 %v244
    %290 = vmatprep.subr.mxu0 0.0
    %291 = vmatpush1.msra.mxu0 %v245
    %292 = vmatprep.subr.mxu0 0.0
    %293 = vmatpush1.msra.mxu0 %v246
    %294 = vmatprep.subr.mxu0 0.0
    %295 = vmatpush1.msra.mxu0 %v247
    %296 = vmatprep.subr.mxu0 0.0
    %297 = vmatpush1.msra.mxu0 %v248
    %298 = vmatprep.subr.mxu0 0.0
    %299 = vmatpush1.msra.mxu0 %v249
    %300 = vmatprep.subr.mxu0 0.0
    %301 = vmatpush1.msra.mxu0 %v250
    %302 = vmatprep.subr.mxu0 0.0
    %303 = vmatpush1.msra.mxu0 %v251
    %304 = vmatprep.subr.mxu0 0.0
    %305 = vmatpush1.msra.mxu0 0.0
    %306 = vmatprep.subr.mxu0 0.0
    %307 = vmatpush1.msra.mxu0 0.0
    %308 = vmatprep.subr.mxu0 0.0
    %309 = vmatpush1.msra.mxu0 0.0
    %310 = vmatprep.subr.mxu0 0.0
    %311 = vmatpush1.msra.mxu0 0.0
    %312 = vmatprep.subr.mxu0 0.0
    %313 = vmatpush1.msra.mxu0 0.0
    %314 = vmatprep.subr.mxu0 0.0
    %315 = vmatpush1.msra.mxu0 0.0
    %316 = vmatprep.subr.mxu0 0.0
    %317 = vmatpush1.msra.mxu0 0.0
    %318 = vmatprep.subr.mxu0 0.0
    %319 = vmatpush1.msra.mxu0 0.0
    %320 = vmatprep.subr.mxu0 0.0
    %321 = vmatpush1.msra.mxu0 0.0
    %322 = vmatprep.subr.mxu0 0.0
    %323 = vmatpush1.msra.mxu0 0.0
    %324 = vmatprep.subr.mxu0 0.0
    %325 = vmatpush1.msra.mxu0 0.0
    %326 = vmatprep.subr.mxu0 0.0
    %327 = vmatpush1.msra.mxu0 0.0
    %328 = vmatprep.subr.mxu0 0.0
    %329 = vmatpush1.msra.mxu0 0.0
    %330 = vmatprep.subr.mxu0 0.0
    %331 = vmatpush1.msra.mxu0 0.0
    %332 = vmatprep.subr.mxu0 0.0
    %333 = vmatpush1.msra.mxu0 0.0
    %334 = vmatprep.subr.mxu0 0.0
    %335 = vmatpush1.msra.mxu0 0.0
    %336 = vmatprep.mubr.f32.mxu0 0.0
    %337 = vmatmul.mubr.f32.gmra.mrb[0].mxu0 %v268
    %v338 = vpop.f32.mrb[0].mxu0
    %v339 = vadd.f32 0.0, %v338
    %v340 = vpop.f32.mrb[0].mxu0
    %341 = vmatprep.mubr.f32.mxu0 0.0
    %342 = vmatmul.mubr.f32.gmra.mrb[0].mxu0 %v269
    %v343 = vpop.f32.mrb[0].mxu0
    %v344 = vadd.f32 0.0, %v343
    %v345 = vpop.f32.mrb[0].mxu0
    %346 = vmatprep.mubr.f32.mxu0 0.0
    %347 = vmatmul.mubr.f32.gmra.mrb[0].mxu0 %v270
    %v348 = vpop.f32.mrb[0].mxu0
    %v349 = vadd.f32 0.0, %v348
    %v350 = vpop.f32.mrb[0].mxu0
    %351 = vmatprep.mubr.f32.mxu0 0.0
    %352 = vmatmul.mubr.f32.gmra.mrb[0].mxu0 %v271
    %v353 = vpop.f32.mrb[0].mxu0
    %v354 = vadd.f32 0.0, %v353
    %v355 = vpop.f32.mrb[0].mxu0
    %356 = vdwg.mxu0
    %v357 = vsub.f32 %v339, %v22
    %v358 = vsub.f32 %v344, %v23
    %v359 = vsub.f32 %v349, %v24
    %v360 = vsub.f32 %v354, %v25
    %v361 = vld [vmem:[%s2] sm:$0xff]
    %v362 = vld [vmem:[%s2 + $0x8] sm:$0xff]
    %v363 = vld [vmem:[%s2 + $0x10] sm:$0xff]
    %v364 = vld [vmem:[%s2 + $0x18] sm:$0xff]
    %v365 = vld [vmem:[%s2 + $0x20] sm:$0xff]
    %v366 = vld [vmem:[%s2 + $0x28] sm:$0xff]
    %v367 = vld [vmem:[%s2 + $0x30] sm:$0xff]
    %v368 = vld [vmem:[%s2 + $0x38] sm:$0xff]
    %v369 = vld [vmem:[%s2 + $0x40] sm:$0xff]
    %v370 = vld [vmem:[%s2 + $0x48] sm:$0xff]
    %v371 = vld [vmem:[%s2 + $0x50] sm:$0xff]
    %v372 = vld [vmem:[%s2 + $0x58] sm:$0xff]
    %v373 = vld [vmem:[%s2 + $0x60] sm:$0xff]
    %v374 = vld [vmem:[%s2 + $0x68] sm:$0xff]
    %v375 = vld [vmem:[%s2 + $0x70] sm:$0xff]
    %v376 = vld [vmem:[%s2 + $0x78] sm:$0xff]
    %v378 = vsel %vm42, %v361, 0
    %v381 = vsel %vm42, %v362, 0
    %v384 = vsel %vm42, %v363, 0
    %v387 = vsel %vm42, %v364, 0
    %v390 = vsel %vm42, %v365, 0
    %v393 = vsel %vm42, %v366, 0
    %v396 = vsel %vm42, %v367, 0
    %v399 = vsel %vm42, %v368, 0
    %v402 = vsel %vm42, %v369, 0
    %v405 = vsel %vm42, %v370, 0
    %v408 = vsel %vm42, %v371, 0
    %v411 = vsel %vm42, %v372, 0
    %v414 = vsel %vm42, %v373, 0
    %v417 = vsel %vm42, %v374, 0
    %v420 = vsel %vm42, %v375, 0
    %v423 = vsel %vm42, %v376, 0
    %425 = vmatprep.subr.mxu0 0.0
    %426 = vmatpush1.msra.mxu0 %v357
    %427 = vmatprep.subr.mxu0 0.0
    %428 = vmatpush1.msra.mxu0 %v358
    %429 = vmatprep.subr.mxu0 0.0
    %430 = vmatpush1.msra.mxu0 %v359
    %431 = vmatprep.subr.mxu0 0.0
    %432 = vmatpush1.msra.mxu0 %v360
    %433 = vmatprep.subr.mxu0 0.0
    %434 = vmatpush1.msra.mxu0 0.0
    %435 = vmatprep.subr.mxu0 0.0
    %436 = vmatpush1.msra.mxu0 0.0
    %437 = vmatprep.subr.mxu0 0.0
    %438 = vmatpush1.msra.mxu0 0.0
    %439 = vmatprep.subr.mxu0 0.0
    %440 = vmatpush1.msra.mxu0 0.0
    %441 = vmatprep.subr.mxu0 0.0
    %442 = vmatpush1.msra.mxu0 0.0
    %443 = vmatprep.subr.mxu0 0.0
    %444 = vmatpush1.msra.mxu0 0.0
    %445 = vmatprep.subr.mxu0 0.0
    %446 = vmatpush1.msra.mxu0 0.0
    %447 = vmatprep.subr.mxu0 0.0
    %448 = vmatpush1.msra.mxu0 0.0
    %449 = vmatprep.subr.mxu0 0.0
    %450 = vmatpush1.msra.mxu0 0.0
    %451 = vmatprep.subr.mxu0 0.0
    %452 = vmatpush1.msra.mxu0 0.0
    %453 = vmatprep.subr.mxu0 0.0
    %454 = vmatpush1.msra.mxu0 0.0
    %455 = vmatprep.subr.mxu0 0.0
    %456 = vmatpush1.msra.mxu0 0.0
    %457 = vmatprep.subr.mxu0 0.0
    %458 = vmatpush1.msra.mxu0 0.0
    %459 = vmatprep.subr.mxu0 0.0
    %460 = vmatpush1.msra.mxu0 0.0
    %461 = vmatprep.subr.mxu0 0.0
    %462 = vmatpush1.msra.mxu0 0.0
    %463 = vmatprep.subr.mxu0 0.0
    %464 = vmatpush1.msra.mxu0 0.0
    %465 = vmatprep.subr.mxu0 0.0
    %466 = vmatpush1.msra.mxu0 0.0
    %467 = vmatprep.subr.mxu0 0.0
    %468 = vmatpush1.msra.mxu0 0.0
    %469 = vmatprep.subr.mxu0 0.0
    %470 = vmatpush1.msra.mxu0 0.0
    %471 = vmatprep.subr.mxu0 0.0
    %472 = vmatpush1.msra.mxu0 0.0
    %473 = vmatprep.subr.mxu0 0.0
    %474 = vmatpush1.msra.mxu0 0.0
    %475 = vmatprep.subr.mxu0 0.0
    %476 = vmatpush1.msra.mxu0 0.0
    %477 = vmatprep.subr.mxu0 0.0
    %478 = vmatpush1.msra.mxu0 0.0
    %479 = vmatprep.subr.mxu0 0.0
    %480 = vmatpush1.msra.mxu0 0.0
    %481 = vmatprep.subr.mxu0 0.0
    %482 = vmatpush1.msra.mxu0 0.0
    %483 = vmatprep.subr.mxu0 0.0
    %484 = vmatpush1.msra.mxu0 0.0
    %485 = vmatprep.subr.mxu0 0.0
    %486 = vmatpush1.msra.mxu0 0.0
    %487 = vmatprep.subr.mxu0 0.0
    %488 = vmatpush1.msra.mxu0 0.0
    %489 = vmatprep.mubr.f32.mxu0 0.0
    %490 = vmatmul.mubr.f32.gmra.mrb[0].mxu0 %v378
    %v491 = vpop.f32.mrb[0].mxu0
    %v492 = vadd.f32 0.0, %v491
    %v493 = vpop.f32.mrb[0].mxu0
    %494 = vmatprep.mubr.f32.mxu0 0.0
    %495 = vmatmul.mubr.f32.gmra.mrb[0].mxu0 %v381
    %v496 = vpop.f32.mrb[0].mxu0
    %v497 = vadd.f32 0.0, %v496
    %v498 = vpop.f32.mrb[0].mxu0
    %499 = vmatprep.mubr.f32.mxu0 0.0
    %500 = vmatmul.mubr.f32.gmra.mrb[0].mxu0 %v384
    %v501 = vpop.f32.mrb[0].mxu0
    %v502 = vadd.f32 0.0, %v501
    %v503 = vpop.f32.mrb[0].mxu0
    %504 = vmatprep.mubr.f32.mxu0 0.0
    %505 = vmatmul.mubr.f32.gmra.mrb[0].mxu0 %v387
    %v506 = vpop.f32.mrb[0].mxu0
    %v507 = vadd.f32 0.0, %v506
    %v508 = vpop.f32.mrb[0].mxu0
    %509 = vmatprep.mubr.f32.mxu0 0.0
    %510 = vmatmul.mubr.f32.gmra.mrb[0].mxu0 %v390
    %v511 = vpop.f32.mrb[0].mxu0
    %v512 = vadd.f32 0.0, %v511
    %v513 = vpop.f32.mrb[0].mxu0
    %514 = vmatprep.mubr.f32.mxu0 0.0
    %515 = vmatmul.mubr.f32.gmra.mrb[0].mxu0 %v393
    %v516 = vpop.f32.mrb[0].mxu0
    %v517 = vadd.f32 0.0, %v516
    %v518 = vpop.f32.mrb[0].mxu0
    %519 = vmatprep.mubr.f32.mxu0 0.0
    %520 = vmatmul.mubr.f32.gmra.mrb[0].mxu0 %v396
    %v521 = vpop.f32.mrb[0].mxu0
    %v522 = vadd.f32 0.0, %v521
    %v523 = vpop.f32.mrb[0].mxu0
    %524 = vmatprep.mubr.f32.mxu0 0.0
    %525 = vmatmul.mubr.f32.gmra.mrb[0].mxu0 %v399
    %v526 = vpop.f32.mrb[0].mxu0
    %v527 = vadd.f32 0.0, %v526
    %v528 = vpop.f32.mrb[0].mxu0
    %529 = vmatprep.mubr.f32.mxu0 0.0
    %530 = vmatmul.mubr.f32.gmra.mrb[0].mxu0 %v402
    %v531 = vpop.f32.mrb[0].mxu0
    %v532 = vadd.f32 0.0, %v531
    %v533 = vpop.f32.mrb[0].mxu0
    %534 = vmatprep.mubr.f32.mxu0 0.0
    %535 = vmatmul.mubr.f32.gmra.mrb[0].mxu0 %v405
    %v536 = vpop.f32.mrb[0].mxu0
    %v537 = vadd.f32 0.0, %v536
    %v538 = vpop.f32.mrb[0].mxu0
    %539 = vmatprep.mubr.f32.mxu0 0.0
    %540 = vmatmul.mubr.f32.gmra.mrb[0].mxu0 %v408
    %v541 = vpop.f32.mrb[0].mxu0
    %v542 = vadd.f32 0.0, %v541
    %v543 = vpop.f32.mrb[0].mxu0
    %544 = vmatprep.mubr.f32.mxu0 0.0
    %545 = vmatmul.mubr.f32.gmra.mrb[0].mxu0 %v411
    %v546 = vpop.f32.mrb[0].mxu0
    %v547 = vadd.f32 0.0, %v546
    %v548 = vpop.f32.mrb[0].mxu0
    %549 = vmatprep.mubr.f32.mxu0 0.0
    %550 = vmatmul.mubr.f32.gmra.mrb[0].mxu0 %v414
    %v551 = vpop.f32.mrb[0].mxu0
    %v552 = vadd.f32 0.0, %v551
    %v553 = vpop.f32.mrb[0].mxu0
    %554 = vmatprep.mubr.f32.mxu0 0.0
    %555 = vmatmul.mubr.f32.gmra.mrb[0].mxu0 %v417
    %v556 = vpop.f32.mrb[0].mxu0
    %v557 = vadd.f32 0.0, %v556
    %v558 = vpop.f32.mrb[0].mxu0
    %559 = vmatprep.mubr.f32.mxu0 0.0
    %560 = vmatmul.mubr.f32.gmra.mrb[0].mxu0 %v420
    %v561 = vpop.f32.mrb[0].mxu0
    %v562 = vadd.f32 0.0, %v561
    %v563 = vpop.f32.mrb[0].mxu0
    %564 = vmatprep.mubr.f32.mxu0 0.0
    %565 = vmatmul.mubr.f32.gmra.mrb[0].mxu0 %v423
    %v566 = vpop.f32.mrb[0].mxu0
    %v567 = vadd.f32 0.0, %v566
    %v568 = vpop.f32.mrb[0].mxu0
    %569 = vdwg.mxu0
    %v570 = vmul.f32 %v492, 0.0009765625
    %v571 = vmul.f32 %v497, 0.0009765625
    %v572 = vmul.f32 %v502, 0.0009765625
    %v573 = vmul.f32 %v507, 0.0009765625
    %v574 = vmul.f32 %v512, 0.0009765625
    %v575 = vmul.f32 %v517, 0.0009765625
    %v576 = vmul.f32 %v522, 0.0009765625
    %v577 = vmul.f32 %v527, 0.0009765625
    %v578 = vmul.f32 %v532, 0.0009765625
    %v579 = vmul.f32 %v537, 0.0009765625
    %v580 = vmul.f32 %v542, 0.0009765625
    %v581 = vmul.f32 %v547, 0.0009765625
    %v582 = vmul.f32 %v552, 0.0009765625
    %v583 = vmul.f32 %v557, 0.0009765625
    %v584 = vmul.f32 %v562, 0.0009765625
    %v585 = vmul.f32 %v567, 0.0009765625
    %586 = vst [vmem:[#allocation4] sm:$0xff] %v570
    %587 = vst [vmem:[#allocation4 + $0x8] sm:$0xff] %v571
    %588 = vst [vmem:[#allocation4 + $0x10] sm:$0xff] %v572
    %589 = vst [vmem:[#allocation4 + $0x18] sm:$0xff] %v573
    %590 = vst [vmem:[#allocation4 + $0x20] sm:$0xff] %v574
    %591 = vst [vmem:[#allocation4 + $0x28] sm:$0xff] %v575
    %592 = vst [vmem:[#allocation4 + $0x30] sm:$0xff] %v576
    %593 = vst [vmem:[#allocation4 + $0x38] sm:$0xff] %v577
    %594 = vst [vmem:[#allocation4 + $0x40] sm:$0xff] %v578
    %595 = vst [vmem:[#allocation4 + $0x48] sm:$0xff] %v579
    %596 = vst [vmem:[#allocation4 + $0x50] sm:$0xff] %v580
    %597 = vst [vmem:[#allocation4 + $0x58] sm:$0xff] %v581
    %598 = vst [vmem:[#allocation4 + $0x60] sm:$0xff] %v582
    %599 = vst [vmem:[#allocation4 + $0x68] sm:$0xff] %v583
    %600 = vst [vmem:[#allocation4 + $0x70] sm:$0xff] %v584
    %601 = vst [vmem:[#allocation4 + $0x78] sm:$0xff] %v585
    %v602 = vmul.f32 %v357, %v357
    %v603 = vmul.f32 %v358, %v358
    %v604 = vmul.f32 %v359, %v359
    %v605 = vmul.f32 %v360, %v360
    %v606 = vadd.f32 %v602, %v603
    %v607 = vadd.f32 %v606, %v604
    %v608 = vadd.f32 %v607, %v605
    %609 = vadd.xlane.f32.xlu0 %v608
    %v610 = vpop.xlane.xlu0 %609
    %v611 = vrot.slane %v610, 4
    %v612 = vadd.f32 %v610, %v611
    %v613 = vrot.slane %v612, 2
    %v614 = vadd.f32 %v612, %v613
    %v615 = vrot.slane %v614, 1
    %v616 = vadd.f32 %v614, %v615
    %s617 = vtos %v616
    %s618 = smul.f32 %s617, 0.00048828125
    %v619 = vstv %s618
    %vm620 = vcmask 0
    %621 = vst.msk [vmem:[#allocation6] sm:$0x1] %vm620, %v619
    // Predicated region
    $region18: #{tpu_custom_call.1} parent=1 // pred_check
      _
    $region19: #{tpu_custom_call.1} parent=1 // pred_check_branch
      %623 = sbr.rel (0) target = $region21
    $region20: #{tpu_custom_call.1} parent=1 // pred_region
      %s625 = ssub.s32 2048, 2048
      %626 = vsyncadd [#allocation3], %s625
      %s627 = sshll.u32 [#allocation2], 4
      %s628 = int_to_ptr.vmem [resolvable:$true] %s627
      %633 = dma.vmem_to_hbm [thread:$0]  %s628, 2048, %s4, [#allocation3], 128, 128, 8
    $region21: #{tpu_custom_call.1} parent=1 // pred_fallthru
      _
    // Predicated region
    $region22: #{tpu_custom_call.1} parent=1 // pred_check
      _
    $region23: #{tpu_custom_call.1} parent=1 // pred_check_branch
      %635 = sbr.rel (0) target = $region25
    $region24: #{tpu_custom_call.1} parent=1 // pred_region
      %s637 = ssub.s32 2048, 2048
      %638 = vsyncadd [#allocation5], %s637
      %s639 = sshll.u32 [#allocation4], 4
      %s640 = int_to_ptr.vmem [resolvable:$true] %s639
      %645 = dma.vmem_to_hbm [thread:$0]  %s640, 2048, %s5, [#allocation5], 128, 128, 8
    $region25: #{tpu_custom_call.1} parent=1 // pred_fallthru
      _
    // Predicated region
    $region26: #{tpu_custom_call.1} parent=1 // pred_check
      _
    $region27: #{tpu_custom_call.1} parent=1 // pred_check_branch
      %647 = sbr.rel (0) target = $region29
    $region28: #{tpu_custom_call.1} parent=1 // pred_region
      %s649 = ssub.s32 16, 16
      %650 = vsyncadd [#allocation5], %s649
      %s652 = sshll.u32 [#allocation6], 4
      %s653 = int_to_ptr.vmem [resolvable:$true] %s652
      %655 = dma.vmem_to_hbm [thread:$0]  %s653, 16, %s6, [#allocation5]
    $region29: #{tpu_custom_call.1} parent=1 // pred_fallthru
      _
    // Predicated region
    $region30: #{tpu_custom_call.1} parent=1 // pred_check
      _
    $region31: #{tpu_custom_call.1} parent=1 // pred_check_branch
      %657 = sbr.rel (0) target = $region33
    $region32: #{tpu_custom_call.1} parent=1 // pred_region
      %658 = dma.done [#allocation3], 2048
    $region33: #{tpu_custom_call.1} parent=1 // pred_fallthru
      _
    // Predicated region
    $region34: #{tpu_custom_call.1} parent=1 // pred_check
      _
    $region35: #{tpu_custom_call.1} parent=1 // pred_check_branch
      %660 = sbr.rel (0) target = $region37
    $region36: #{tpu_custom_call.1} parent=1 // pred_region
      %661 = dma.done [#allocation5], 2048
    $region37: #{tpu_custom_call.1} parent=1 // pred_fallthru
      _
    // Predicated region
    $region38: #{tpu_custom_call.1} parent=1 // pred_check
      _
    $region39: #{tpu_custom_call.1} parent=1 // pred_check_branch
      %663 = sbr.rel (0) target = $region41
    $region40: #{tpu_custom_call.1} parent=1 // pred_region
      %664 = dma.done [#allocation5], 16
    $region41: #{tpu_custom_call.1} parent=1 // pred_fallthru
      _
    %665 = vsyncpa [#allocation3], 1
    %666 = vsyncpa [#allocation5], 1

</llo_original>
